<compile_context>
chip_gen: v6e
topology: v6e:2x2x1
jax: 0.10.0
libtpu: 0.0.40
codegen_flags: <defaults>
</compile_context>

<pallas_src>
import functools

import jax
import jax.numpy as jnp
from jax.experimental import pallas as pl
from jax.experimental.pallas import tpu as pltpu

EPS = 1e-5      # BatchNorm1d default eps
LANE = 128      # TPU lane width


def _round_up(n, m):
    return (n + m - 1) // m * m


def inblock_kernel(x_ref, w1_ref, w2_ref, vec_ref, o_ref, *, n_hidden):
    # x arrives at its real (B, n_features) width in f32; casting this narrow
    # tile to bf16 here (one tiny VPU pass) avoids an extra HBM convert pass.
    x = x_ref[...].astype(jnp.bfloat16)

    # Stacked per-layer vectors: [b1, g1, be1, b2, g2, be2], each (1, hp) f32.
    b1, g1, be1 = vec_ref[0:1, :], vec_ref[1:2, :], vec_ref[2:3, :]
    b2, g2, be2 = vec_ref[3:4, :], vec_ref[4:5, :], vec_ref[5:6, :]

    # ---- fc1 (spectral-norm Linear, bf16 weights) + ReLU ----
    h = jnp.dot(x, w1_ref[...], preferred_element_type=jnp.float32) + b1
    h = jnp.maximum(h, 0.0)

    # ---- BN1: fused one-pass (sum & sum-of-squares), training-mode stats.
    # Padded hidden columns have gamma = beta = 0, so they stay exactly zero.
    # The affine result is emitted directly as bf16 = the fc2 MXU operand.
    mu = jnp.mean(h, axis=0, keepdims=True)
    ex2 = jnp.mean(h * h, axis=0, keepdims=True)
    var = jnp.maximum(ex2 - mu * mu, 0.0)           # biased variance
    scale = g1 * jax.lax.rsqrt(var + EPS)
    shift = be1 - scale * mu
    h = (h * scale + shift).astype(jnp.bfloat16)

    # ---- fc2 (spectral-norm Linear, bf16 weights) + ReLU ----
    h = jnp.dot(h, w2_ref[...], preferred_element_type=jnp.float32) + b2
    h = jnp.maximum(h, 0.0)

    # ---- BN2 (same fused form, f32 output) ----
    mu = jnp.mean(h, axis=0, keepdims=True)
    ex2 = jnp.mean(h * h, axis=0, keepdims=True)
    var = jnp.maximum(ex2 - mu * mu, 0.0)
    scale = g2 * jax.lax.rsqrt(var + EPS)
    shift = be2 - scale * mu
    out = h * scale + shift

    # Real-width store: only the first n_hidden (valid) feature columns go to
    # HBM, so the wrapper never slices.
    o_ref[...] = out[:, :n_hidden]


def init_params(key, n_features, n_hidden):
    """Weights stored in bf16 with the hidden dim lane-padded to 128.

    Zero padding is exact: padded hidden columns have zero weight columns /
    bias / gamma / beta (so their activations and BN outputs are 0), and w2's
    padded fan-in rows are zero.
    """
    hp = _round_up(n_hidden, LANE)
    k1, k2, kb1, kb2 = jax.random.split(key, 4)

    def sn_linear(kw, kb, fan_in, fan_out):
        w = jax.random.normal(kw, (fan_in, fan_out), jnp.float32) / jnp.sqrt(float(fan_in))
        # TODO(synk): torch.nn.utils.spectral_norm uses a 1-step power-iteration
        # estimate of sigma; the exact largest singular value is used here.
        w = w / jnp.linalg.norm(w, ord=2)
        b = 0.1 * jax.random.normal(kb, (fan_out,), jnp.float32)
        return w, b

    w1, b1 = sn_linear(k1, kb1, n_features, n_hidden)
    w2, b2 = sn_linear(k2, kb2, n_hidden, n_hidden)

    w1_p = (jnp.zeros((n_features, hp), jnp.float32)
            .at[:, :n_hidden].set(w1).astype(jnp.bfloat16))
    w2_p = (jnp.zeros((hp, hp), jnp.float32)
            .at[:n_hidden, :n_hidden].set(w2).astype(jnp.bfloat16))

    vec = jnp.zeros((6, hp), jnp.float32)
    vec = vec.at[0, :n_hidden].set(b1)      # bias1
    vec = vec.at[1, :n_hidden].set(1.0)     # gamma1
    # vec[2] = beta1 = 0
    vec = vec.at[3, :n_hidden].set(b2)      # bias2
    vec = vec.at[4, :n_hidden].set(1.0)     # gamma2
    # vec[5] = beta2 = 0
    return {"w1": w1_p, "w2": w2_p, "vec": vec}


@functools.partial(jax.jit, static_argnames=("n_features", "n_hidden"))
def inblock_fc_forward(x_in, params, *, n_features, n_hidden):
    # x.view(-1, n_features), exactly as in InBlockFC.forward.
    x = x_in.reshape(-1, n_features)
    b = x.shape[0]
    hp = params["w1"].shape[1]

    w_bytes = params["w1"].size * 2 + params["w2"].size * 2 + params["vec"].size * 4
    io_bytes = x.size * 4 + b * n_hidden * 4
    # Double-buffered I/O + f32 intermediates + headroom; clamp to v7x's 64 MiB VMEM.
    vmem_limit = int(min(max(2 * (io_bytes + w_bytes) + 8 * b * hp * 4 + (1 << 20),
                             4 << 20), 64 << 20))
    cost = pl.CostEstimate(
        flops=2 * b * (n_features * hp + hp * hp) + 12 * b * hp,
        transcendentals=2 * hp,
        bytes_accessed=io_bytes + w_bytes,
    )

    return pl.pallas_call(
        functools.partial(inblock_kernel, n_hidden=n_hidden),
        out_shape=jax.ShapeDtypeStruct((b, n_hidden), jnp.float32),
        in_specs=[pl.BlockSpec(memory_space=pltpu.MemorySpace.VMEM)] * 4,
        out_specs=pl.BlockSpec(memory_space=pltpu.MemorySpace.VMEM),
        compiler_params=pltpu.CompilerParams(vmem_limit_bytes=vmem_limit),
        cost_estimate=cost,
    )(x, params["w1"], params["w2"], params["vec"])


def ref_forward(x_in, params, n_features, n_hidden):
    """Pure-JAX reference (canonical two-pass BN, same bf16 MXU boundaries)."""
    x = x_in.reshape(-1, n_features).astype(jnp.bfloat16)
    w1 = params["w1"][:, :n_hidden]
    w2 = params["w2"][:n_hidden, :n_hidden]
    vec = params["vec"]
    b1, g1, be1 = vec[0, :n_hidden], vec[1, :n_hidden], vec[2, :n_hidden]
    b2, g2, be2 = vec[3, :n_hidden], vec[4, :n_hidden], vec[5, :n_hidden]

    def bn(h, g, be):
        mu = jnp.mean(h, axis=0, keepdims=True)
        var = jnp.mean((h - mu) ** 2, axis=0, keepdims=True)
        return g * (h - mu) * jax.lax.rsqrt(var + EPS) + be

    def dot(a, w):
        return jnp.dot(a, w, preferred_element_type=jnp.float32)

    h = jnp.maximum(dot(x, w1) + b1, 0.0)
    h = bn(h, g1, be1).astype(jnp.bfloat16)          # matches kernel's fc2 operand
    h = jnp.maximum(dot(h, w2) + b2, 0.0)
    h = bn(h, g2, be2)
    return h


if __name__ == "__main__":
    n_features, n_hidden = 16, 32

    key = jax.random.PRNGKey(0)
    k_param, k_x = jax.random.split(key)

    params = init_params(k_param, n_features, n_hidden)

    # (2, 9, 16) input -> view(-1, 16) inside forward: 18 batch rows
    # (deliberately not a multiple of 8, to exercise the unpadded-batch path).
    x = jax.random.normal(k_x, (2, 9, n_features), jnp.float32)

    out = inblock_fc_forward(x, params, n_features=n_features, n_hidden=n_hidden)
    out = jax.block_until_ready(out)

    ref = ref_forward(x, params, n_features, n_hidden)

    assert out.shape == (18, n_hidden)
    assert bool(jnp.all(jnp.isfinite(out)))
    max_err = float(jnp.max(jnp.abs(out - ref)))
    assert max_err < 1e-2, f"max abs err vs reference: {max_err}"
    print("KERNEL_OK")
</pallas_src>

<mosaic_0001>
module attributes {stable_mosaic.version = 11 : i64} {
  func.func @inblock_kernel(%arg0: memref<18x16xf32, #tpu.memory_space<vmem>>, %arg1: memref<16x128xbf16, #tpu.memory_space<vmem>>, %arg2: memref<128x128xbf16, #tpu.memory_space<vmem>>, %arg3: memref<6x128xf32, #tpu.memory_space<vmem>>, %arg4: memref<18x32xf32, #tpu.memory_space<vmem>>) attributes {dimension_semantics = [], scalar_prefetch = 0 : i64, scratch_operands = 0 : i64, tpu.core_type = #tpu.core_type<tc>} {
    %c0 = arith.constant 0 : index
    %c0_0 = arith.constant 0 : index
    %0 = vector.load %arg0[%c0, %c0_0] : memref<18x16xf32, #tpu.memory_space<vmem>>, vector<18x16xf32>
    %1 = arith.truncf %0 : vector<18x16xf32> to vector<18x16xbf16>
    %c0_1 = arith.constant 0 : index
    %c0_2 = arith.constant 0 : index
    %2 = vector.load %arg3[%c0_1, %c0_2] : memref<6x128xf32, #tpu.memory_space<vmem>>, vector<1x128xf32>
    %c1 = arith.constant 1 : index
    %c0_3 = arith.constant 0 : index
    %3 = vector.load %arg3[%c1, %c0_3] : memref<6x128xf32, #tpu.memory_space<vmem>>, vector<1x128xf32>
    %c2 = arith.constant 2 : index
    %c0_4 = arith.constant 0 : index
    %4 = vector.load %arg3[%c2, %c0_4] : memref<6x128xf32, #tpu.memory_space<vmem>>, vector<1x128xf32>
    %c3 = arith.constant 3 : index
    %c0_5 = arith.constant 0 : index
    %5 = vector.load %arg3[%c3, %c0_5] : memref<6x128xf32, #tpu.memory_space<vmem>>, vector<1x128xf32>
    %c4 = arith.constant 4 : index
    %c0_6 = arith.constant 0 : index
    %6 = vector.load %arg3[%c4, %c0_6] : memref<6x128xf32, #tpu.memory_space<vmem>>, vector<1x128xf32>
    %c5 = arith.constant 5 : index
    %c0_7 = arith.constant 0 : index
    %7 = vector.load %arg3[%c5, %c0_7] : memref<6x128xf32, #tpu.memory_space<vmem>>, vector<1x128xf32>
    %c0_8 = arith.constant 0 : index
    %c0_9 = arith.constant 0 : index
    %8 = vector.load %arg1[%c0_8, %c0_9] : memref<16x128xbf16, #tpu.memory_space<vmem>>, vector<16x128xbf16>
    %cst = arith.constant dense<0.000000e+00> : vector<18x128xf32>
    %9 = tpu.matmul %1, %8, %cst {dimension_numbers = #tpu.dot_dimension_numbers<[1], [0], [0], [1], [0, 0, 1, 1], [], []>} : vector<18x16xbf16>, vector<16x128xbf16>, vector<18x128xf32> -> vector<18x128xf32>
    %10 = vector.broadcast %2 : vector<1x128xf32> to vector<18x128xf32>
    %11 = arith.addf %9, %10 : vector<18x128xf32>
    %cst_10 = arith.constant 0.000000e+00 : f32
    %12 = vector.broadcast %cst_10 : f32 to vector<18x128xf32>
    %13 = arith.maximumf %11, %12 : vector<18x128xf32>
    %cst_11 = arith.constant dense<0.000000e+00> : vector<128xf32>
    %14 = vector.multi_reduction <add>, %13, %cst_11 [0] : vector<18x128xf32> to vector<128xf32>
    %15 = vector.shape_cast %14 : vector<128xf32> to vector<1x128xf32>
    %cst_12 = arith.constant 1.800000e+01 : f32
    %16 = vector.broadcast %cst_12 : f32 to vector<1x128xf32>
    %17 = arith.divf %15, %16 : vector<1x128xf32>
    %18 = arith.mulf %13, %13 : vector<18x128xf32>
    %cst_13 = arith.constant dense<0.000000e+00> : vector<128xf32>
    %19 = vector.multi_reduction <add>, %18, %cst_13 [0] : vector<18x128xf32> to vector<128xf32>
    %20 = vector.shape_cast %19 : vector<128xf32> to vector<1x128xf32>
    %cst_14 = arith.constant 1.800000e+01 : f32
    %21 = vector.broadcast %cst_14 : f32 to vector<1x128xf32>
    %22 = arith.divf %20, %21 : vector<1x128xf32>
    %23 = arith.mulf %17, %17 : vector<1x128xf32>
    %24 = arith.subf %22, %23 : vector<1x128xf32>
    %cst_15 = arith.constant 0.000000e+00 : f32
    %25 = vector.broadcast %cst_15 : f32 to vector<1x128xf32>
    %26 = arith.maximumf %24, %25 : vector<1x128xf32>
    %cst_16 = arith.constant 9.99999974E-6 : f32
    %27 = vector.broadcast %cst_16 : f32 to vector<1x128xf32>
    %28 = arith.addf %26, %27 : vector<1x128xf32>
    %29 = math.rsqrt %28 : vector<1x128xf32>
    %30 = arith.mulf %3, %29 : vector<1x128xf32>
    %31 = arith.mulf %30, %17 : vector<1x128xf32>
    %32 = arith.subf %4, %31 : vector<1x128xf32>
    %33 = vector.broadcast %30 : vector<1x128xf32> to vector<18x128xf32>
    %34 = arith.mulf %13, %33 : vector<18x128xf32>
    %35 = vector.broadcast %32 : vector<1x128xf32> to vector<18x128xf32>
    %36 = arith.addf %34, %35 : vector<18x128xf32>
    %37 = arith.truncf %36 : vector<18x128xf32> to vector<18x128xbf16>
    %c0_17 = arith.constant 0 : index
    %c0_18 = arith.constant 0 : index
    %38 = vector.load %arg2[%c0_17, %c0_18] : memref<128x128xbf16, #tpu.memory_space<vmem>>, vector<128x128xbf16>
    %cst_19 = arith.constant dense<0.000000e+00> : vector<18x128xf32>
    %39 = tpu.matmul %37, %38, %cst_19 {dimension_numbers = #tpu.dot_dimension_numbers<[1], [0], [0], [1], [0, 0, 1, 1], [], []>} : vector<18x128xbf16>, vector<128x128xbf16>, vector<18x128xf32> -> vector<18x128xf32>
    %40 = vector.broadcast %5 : vector<1x128xf32> to vector<18x128xf32>
    %41 = arith.addf %39, %40 : vector<18x128xf32>
    %cst_20 = arith.constant 0.000000e+00 : f32
    %42 = vector.broadcast %cst_20 : f32 to vector<18x128xf32>
    %43 = arith.maximumf %41, %42 : vector<18x128xf32>
    %cst_21 = arith.constant dense<0.000000e+00> : vector<128xf32>
    %44 = vector.multi_reduction <add>, %43, %cst_21 [0] : vector<18x128xf32> to vector<128xf32>
    %45 = vector.shape_cast %44 : vector<128xf32> to vector<1x128xf32>
    %cst_22 = arith.constant 1.800000e+01 : f32
    %46 = vector.broadcast %cst_22 : f32 to vector<1x128xf32>
    %47 = arith.divf %45, %46 : vector<1x128xf32>
    %48 = arith.mulf %43, %43 : vector<18x128xf32>
    %cst_23 = arith.constant dense<0.000000e+00> : vector<128xf32>
    %49 = vector.multi_reduction <add>, %48, %cst_23 [0] : vector<18x128xf32> to vector<128xf32>
    %50 = vector.shape_cast %49 : vector<128xf32> to vector<1x128xf32>
    %cst_24 = arith.constant 1.800000e+01 : f32
    %51 = vector.broadcast %cst_24 : f32 to vector<1x128xf32>
    %52 = arith.divf %50, %51 : vector<1x128xf32>
    %53 = arith.mulf %47, %47 : vector<1x128xf32>
    %54 = arith.subf %52, %53 : vector<1x128xf32>
    %cst_25 = arith.constant 0.000000e+00 : f32
    %55 = vector.broadcast %cst_25 : f32 to vector<1x128xf32>
    %56 = arith.maximumf %54, %55 : vector<1x128xf32>
    %cst_26 = arith.constant 9.99999974E-6 : f32
    %57 = vector.broadcast %cst_26 : f32 to vector<1x128xf32>
    %58 = arith.addf %56, %57 : vector<1x128xf32>
    %59 = math.rsqrt %58 : vector<1x128xf32>
    %60 = arith.mulf %6, %59 : vector<1x128xf32>
    %61 = arith.mulf %60, %47 : vector<1x128xf32>
    %62 = arith.subf %7, %61 : vector<1x128xf32>
    %63 = vector.broadcast %60 : vector<1x128xf32> to vector<18x128xf32>
    %64 = arith.mulf %43, %63 : vector<18x128xf32>
    %65 = vector.broadcast %62 : vector<1x128xf32> to vector<18x128xf32>
    %66 = arith.addf %64, %65 : vector<18x128xf32>
    %67 = vector.extract_strided_slice %66 {offsets = [0, 0], sizes = [18, 32], strides = [1, 1]} : vector<18x128xf32> to vector<18x32xf32>
    %c0_27 = arith.constant 0 : index
    %c0_28 = arith.constant 0 : index
    %68 = vector.load %arg4[%c0_27, %c0_28] : memref<18x32xf32, #tpu.memory_space<vmem>>, vector<18x32xf32>
    tpu.vector_store %arg4[%c0_27, %c0_28], %67 {strides = array<i32>} : memref<18x32xf32, #tpu.memory_space<vmem>>, vector<18x32xf32>,
    return
  }
}

</mosaic_0001>

<llo_original>
// kernel: inblock_fc_forward.1
$region0: #{inblock_fc_forward.1}
  #allocation0 [shape = 'u32[]', space=smem, size = 0x4, offset = 0x4, fixed_abs, tag = 'smem constant byte address 0x4 - core index']
  #allocation1 [shape = 'u32[144,128]{1,0:T(1,128)}', space=vmem, size = 0x12000, scoped, tag = 'internal scratch']
  %s0 = inlined_call_operand.vmem [shape: f32[18,16], index: 0, kind: input, shape index: {}]
  %s1 = inlined_call_operand.vmem [shape: bf16[16,128], index: 1, kind: input, shape index: {}]
  %s2 = inlined_call_operand.vmem [shape: bf16[128,128], index: 2, kind: input, shape index: {}]
  %s3 = inlined_call_operand.vmem [shape: f32[6,128], index: 3, kind: input, shape index: {}]
  %s4 = inlined_call_operand.hbm [shape: f32[18,32], index: 4, kind: output, shape index: {}]
  %s5 = sld [smem:[#allocation0]]
  $region26: #{inblock_fc_forward.1} parent=0
    _
  %s7 = ssub.s32 1, %s5
  %s8 = scalar_select 0, %s7, %s5
  $region1: #{inblock_fc_forward.1} parent=0
    #allocation2 [shape = 'u8[12288]{0}', space=vmem, size = 0x3000, scoped, tag = 'output window, operand 0, single buffered']
    #allocation3 [shape = 's32[1]{0}', space=sflag, size = 0x4, scoped, tag = 'scoped memory for inblock_fc_forward.1']
    %9 = vsyncpa [#allocation3], 0
    // Predicated region
    $region2: #{inblock_fc_forward.1} parent=1 // pred_check
      _
    $region3: #{inblock_fc_forward.1} parent=1 // pred_check_branch
      %11 = sbr.rel (0) target = $region5
    $region4: #{inblock_fc_forward.1} parent=1 // pred_region
      _
    $region5: #{inblock_fc_forward.1} parent=1 // pred_fallthru
      _
    // Predicated region
    $region6: #{inblock_fc_forward.1} parent=1 // pred_check
      _
    $region7: #{inblock_fc_forward.1} parent=1 // pred_check_branch
      %13 = sbr.rel (0) target = $region9
    $region8: #{inblock_fc_forward.1} parent=1 // pred_region
      _
    $region9: #{inblock_fc_forward.1} parent=1 // pred_fallthru
      _
    // Predicated region
    $region10: #{inblock_fc_forward.1} parent=1 // pred_check
      _
    $region11: #{inblock_fc_forward.1} parent=1 // pred_check_branch
      %15 = sbr.rel (0) target = $region13
    $region12: #{inblock_fc_forward.1} parent=1 // pred_region
      _
    $region13: #{inblock_fc_forward.1} parent=1 // pred_fallthru
      _
    // Predicated region
    $region14: #{inblock_fc_forward.1} parent=1 // pred_check
      _
    $region15: #{inblock_fc_forward.1} parent=1 // pred_check_branch
      %17 = sbr.rel (0) target = $region17
    $region16: #{inblock_fc_forward.1} parent=1 // pred_region
      _
    $region17: #{inblock_fc_forward.1} parent=1 // pred_fallthru
      _
    %v19 = vld [vmem:[%s0] sm:$0xff]
    %v20 = vld [vmem:[%s0 + $0x8] sm:$0xff]
    %v21 = vld [vmem:[%s0 + $0x10] sm:$0x3]
    %v22 = vpack.c.bf16 %v20, %v19
    %v23 = vpack.c.bf16 %v21, %v21
    %v24 = vld [vmem:[%s3] sm:$0x1]
    %v25 = vld [vmem:[%s3 + $0x1] sm:$0x1]
    %v26 = vld [vmem:[%s3 + $0x2] sm:$0x1]
    %v27 = vld [vmem:[%s3 + $0x3] sm:$0x1]
    %v28 = vld [vmem:[%s3 + $0x4] sm:$0x1]
    %v29 = vld [vmem:[%s3 + $0x5] sm:$0x1]
    %v30 = vld [vmem:[%s1] sm:$0xf]
    %v31 = vld [vmem:[%s1 + $0x4] sm:$0xf]
    %v32 = vlaneseq
    %v33 = vshrl.u32 %v32, 7
    %v34 = vsub.s32 0, %v33
    %v35 = vrot.slane %v24, %v34
    %v38 = vunpack.c.l.b16 %v30
    %v39 = vunpack.c.l.b16 %v31
    %v40 = vpack.c.b16 %v39, %v38
    %vm42 = vcmask 130048
    %v44 = vsel %vm42, %v22, 0
    %v47 = vsel %vm42, %v23, 0
    %49 = vmatprep.subr.bf16.mxu0 0
    %50 = vmatpush1.bf16.msra.mxu0 0
    %51 = vmatprep.subr.bf16.mxu0 0
    %52 = vmatpush1.bf16.msra.mxu0 0
    %53 = vmatprep.subr.bf16.mxu0 0
    %54 = vmatpush1.bf16.msra.mxu0 0
    %55 = vmatprep.subr.bf16.mxu0 0
    %56 = vmatpush1.bf16.msra.mxu0 0
    %57 = vmatprep.subr.bf16.mxu0 0
    %58 = vmatpush1.bf16.msra.mxu0 0
    %59 = vmatprep.subr.bf16.mxu0 0
    %60 = vmatpush1.bf16.msra.mxu0 0
    %61 = vmatprep.subr.bf16.mxu0 0
    %62 = vmatpush1.bf16.msra.mxu0 0
    %63 = vmatprep.subr.bf16.mxu0 0
    %64 = vmatpush1.bf16.msra.mxu0 %v40
    %65 = vmatprep.subr.bf16.mxu0 0
    %66 = vmatpush2.bf16.msra.mxu0 0
    %67 = vmatprep.subr.bf16.mxu0 0
    %68 = vmatpush2.bf16.msra.mxu0 0
    %69 = vmatprep.subr.bf16.mxu0 0
    %70 = vmatpush2.bf16.msra.mxu0 0
    %71 = vmatprep.subr.bf16.mxu0 0
    %72 = vmatpush2.bf16.msra.mxu0 0
    %73 = vmatprep.subr.bf16.mxu0 0
    %74 = vmatpush2.bf16.msra.mxu0 0
    %75 = vmatprep.subr.bf16.mxu0 0
    %76 = vmatpush2.bf16.msra.mxu0 0
    %77 = vmatprep.subr.bf16.mxu0 0
    %78 = vmatpush2.bf16.msra.mxu0 0
    %79 = vmatprep.subr.bf16.mxu0 0
    %80 = vmatpush2.bf16.msra.mxu0 0
    %81 = vmatprep.mubr.bf16.mxu0 0
    %82 = vmatmul.mubr.bf16.gmra.mxu0 %v44
    %v83 = vpop.f32.mrf.mxu0
    %v84 = vadd.f32 %v35, %v83
    %v85 = vpop.f32.mrf.mxu0
    %v86 = vpop.f32.mrf.mxu0
    %v87 = vadd.f32 %v35, %v86
    %v88 = vpop.f32.mrf.mxu0
    %89 = vmatprep.mubr.bf16.mxu0 0
    %90 = vmatmul.mubr.bf16.gmra.mxu0 %v47
    %v91 = vpop.f32.mrf.mxu0
    %v92 = vadd.f32 %v35, %v91
    %v93 = vpop.f32.mrf.mxu0
    %v94 = vpop.f32.mrf.mxu0
    %v95 = vpop.f32.mrf.mxu0
    %96 = vdwg.mxu0
    %v97 = vmax.f32 %v84, 0.0
    %v98 = vmax.f32 %v87, 0.0
    %v99 = vmax.f32 %v92, 0.0
    %v100 = vadd.f32 %v97, %v98
    %vm101 = vcmask 1041408
    %v102 = vsel %vm101, %v99, 0.0
    %v103 = vadd.f32 %v100, %v102
    %v104 = vrot.slane %v103, 4
    %v105 = vadd.f32 %v103, %v104
    %v106 = vrot.slane %v105, 2
    %v107 = vadd.f32 %v105, %v106
    %v108 = vrot.slane %v107, 1
    %v109 = vadd.f32 %v107, %v108
    %v110 = vrcp.pop 18.0
    %v111 = vmul.f32 %v109, %v110
    %v112 = vmul.f32 %v97, %v97
    %v113 = vmul.f32 %v98, %v98
    %v114 = vmul.f32 %v99, %v99
    %v115 = vadd.f32 %v112, %v113
    %v116 = vsel %vm101, %v114, 0.0
    %v117 = vadd.f32 %v115, %v116
    %v118 = vrot.slane %v117, 4
    %v119 = vadd.f32 %v117, %v118
    %v120 = vrot.slane %v119, 2
    %v121 = vadd.f32 %v119, %v120
    %v122 = vrot.slane %v121, 1
    %v123 = vadd.f32 %v121, %v122
    %v124 = vmul.f32 %v123, %v110
    %v125 = vmul.f32 %v111, %v111
    %v126 = vsub.f32 %v124, %v125
    %v127 = vmax.f32 %v126, 0.0
    %v128 = vadd.f32 %v127, 1e-05
    %v129 = vrsqrt.pop %v128
    %v130 = vmul.f32 %v25, %v129
    %v131 = vmul.f32 %v130, %v111
    %v132 = vsub.f32 %v26, %v131
    %v133 = vlaneseq
    %v134 = vshrl.u32 %v133, 7
    %v135 = vsub.s32 0, %v134
    %v136 = vrot.slane %v130, %v135
    %v137 = vmul.f32 %v97, %v136
    %v138 = vmul.f32 %v98, %v136
    %v139 = vmul.f32 %v99, %v136
    %v140 = vlaneseq
    %v141 = vshrl.u32 %v140, 7
    %v142 = vsub.s32 0, %v141
    %v143 = vrot.slane %v132, %v142
    %v144 = vadd.f32 %v137, %v143
    %v145 = vadd.f32 %v138, %v143
    %v146 = vadd.f32 %v139, %v143
    %v147 = vpack.c.bf16 %v145, %v144
    %v148 = vpack.c.bf16 %v146, %v146
    %v149 = vld [vmem:[%s2] sm:$0xf]
    %v150 = vld [vmem:[%s2 + $0x4] sm:$0xf]
    %v151 = vld [vmem:[%s2 + $0x8] sm:$0xf]
    %v152 = vld [vmem:[%s2 + $0xc] sm:$0xf]
    %v153 = vld [vmem:[%s2 + $0x10] sm:$0xf]
    %v154 = vld [vmem:[%s2 + $0x14] sm:$0xf]
    %v155 = vld [vmem:[%s2 + $0x18] sm:$0xf]
    %v156 = vld [vmem:[%s2 + $0x1c] sm:$0xf]
    %v157 = vld [vmem:[%s2 + $0x20] sm:$0xf]
    %v158 = vld [vmem:[%s2 + $0x24] sm:$0xf]
    %v159 = vld [vmem:[%s2 + $0x28] sm:$0xf]
    %v160 = vld [vmem:[%s2 + $0x2c] sm:$0xf]
    %v161 = vld [vmem:[%s2 + $0x30] sm:$0xf]
    %v162 = vld [vmem:[%s2 + $0x34] sm:$0xf]
    %v163 = vld [vmem:[%s2 + $0x38] sm:$0xf]
    %v164 = vld [vmem:[%s2 + $0x3c] sm:$0xf]
    %v165 = vlaneseq
    %v166 = vshrl.u32 %v165, 7
    %v167 = vsub.s32 0, %v166
    %v168 = vrot.slane %v27, %v167
    %v185 = vunpack.c.l.b16 %v149
    %v186 = vunpack.c.l.b16 %v150
    %v187 = vunpack.c.l.b16 %v151
    %v188 = vunpack.c.l.b16 %v152
    %v189 = vunpack.c.l.b16 %v153
    %v190 = vunpack.c.l.b16 %v154
    %v191 = vunpack.c.l.b16 %v155
    %v192 = vunpack.c.l.b16 %v156
    %v193 = vunpack.c.l.b16 %v157
    %v194 = vunpack.c.l.b16 %v158
    %v195 = vunpack.c.l.b16 %v159
    %v196 = vunpack.c.l.b16 %v160
    %v197 = vunpack.c.l.b16 %v161
    %v198 = vunpack.c.l.b16 %v162
    %v199 = vunpack.c.l.b16 %v163
    %v200 = vunpack.c.l.b16 %v164
    %v201 = vpack.c.b16 %v186, %v185
    %v202 = vpack.c.b16 %v188, %v187
    %v203 = vpack.c.b16 %v190, %v189
    %v204 = vpack.c.b16 %v192, %v191
    %v205 = vpack.c.b16 %v194, %v193
    %v206 = vpack.c.b16 %v196, %v195
    %v207 = vpack.c.b16 %v198, %v197
    %v208 = vpack.c.b16 %v200, %v199
    %217 = vmatprep.subr.bf16.mxu0 0
    %218 = vmatpush1.bf16.msra.mxu0 %v208
    %219 = vmatprep.subr.bf16.mxu0 0
    %220 = vmatpush1.bf16.msra.mxu0 %v207
    %221 = vmatprep.subr.bf16.mxu0 0
    %222 = vmatpush1.bf16.msra.mxu0 %v206
    %223 = vmatprep.subr.bf16.mxu0 0
    %224 = vmatpush1.bf16.msra.mxu0 %v205
    %225 = vmatprep.subr.bf16.mxu0 0
    %226 = vmatpush1.bf16.msra.mxu0 %v204
    %227 = vmatprep.subr.bf16.mxu0 0
    %228 = vmatpush1.bf16.msra.mxu0 %v203
    %229 = vmatprep.subr.bf16.mxu0 0
    %230 = vmatpush1.bf16.msra.mxu0 %v202
    %231 = vmatprep.subr.bf16.mxu0 0
    %232 = vmatpush1.bf16.msra.mxu0 %v201
    %233 = vmatprep.subr.bf16.mxu0 0
    %234 = vmatpush2.bf16.msra.mxu0 0
    %235 = vmatprep.subr.bf16.mxu0 0
    %236 = vmatpush2.bf16.msra.mxu0 0
    %237 = vmatprep.subr.bf16.mxu0 0
    %238 = vmatpush2.bf16.msra.mxu0 0
    %239 = vmatprep.subr.bf16.mxu0 0
    %240 = vmatpush2.bf16.msra.mxu0 0
    %241 = vmatprep.subr.bf16.mxu0 0
    %242 = vmatpush2.bf16.msra.mxu0 0
    %243 = vmatprep.subr.bf16.mxu0 0
    %244 = vmatpush2.bf16.msra.mxu0 0
    %245 = vmatprep.subr.bf16.mxu0 0
    %246 = vmatpush2.bf16.msra.mxu0 0
    %247 = vmatprep.subr.bf16.mxu0 0
    %248 = vmatpush2.bf16.msra.mxu0 0
    %249 = vmatprep.mubr.bf16.mxu0 0
    %250 = vmatmul.mubr.bf16.gmra.mxu0 %v147
    %v251 = vpop.f32.mrf.mxu0
    %v252 = vadd.f32 %v168, %v251
    %v253 = vpop.f32.mrf.mxu0
    %v254 = vpop.f32.mrf.mxu0
    %v255 = vadd.f32 %v168, %v254
    %v256 = vpop.f32.mrf.mxu0
    %257 = vmatprep.mubr.bf16.mxu0 0
    %258 = vmatmul.mubr.bf16.gmra.mxu0 %v148
    %v259 = vpop.f32.mrf.mxu0
    %v260 = vadd.f32 %v168, %v259
    %v261 = vpop.f32.mrf.mxu0
    %v262 = vpop.f32.mrf.mxu0
    %v263 = vpop.f32.mrf.mxu0
    %264 = vdwg.mxu0
    %v265 = vmax.f32 %v252, 0.0
    %v266 = vmax.f32 %v255, 0.0
    %v267 = vmax.f32 %v260, 0.0
    %v268 = vadd.f32 %v265, %v266
    %v269 = vsel %vm101, %v267, 0.0
    %v270 = vadd.f32 %v268, %v269
    %v271 = vrot.slane %v270, 4
    %v272 = vadd.f32 %v270, %v271
    %v273 = vrot.slane %v272, 2
    %v274 = vadd.f32 %v272, %v273
    %v275 = vrot.slane %v274, 1
    %v276 = vadd.f32 %v274, %v275
    %v277 = vmul.f32 %v276, %v110
    %v278 = vmul.f32 %v265, %v265
    %v279 = vmul.f32 %v266, %v266
    %v280 = vmul.f32 %v267, %v267
    %v281 = vadd.f32 %v278, %v279
    %v282 = vsel %vm101, %v280, 0.0
    %v283 = vadd.f32 %v281, %v282
    %v284 = vrot.slane %v283, 4
    %v285 = vadd.f32 %v283, %v284
    %v286 = vrot.slane %v285, 2
    %v287 = vadd.f32 %v285, %v286
    %v288 = vrot.slane %v287, 1
    %v289 = vadd.f32 %v287, %v288
    %v290 = vmul.f32 %v289, %v110
    %v291 = vmul.f32 %v277, %v277
    %v292 = vsub.f32 %v290, %v291
    %v293 = vmax.f32 %v292, 0.0
    %v294 = vadd.f32 %v293, 1e-05
    %v295 = vrsqrt.pop %v294
    %v296 = vmul.f32 %v28, %v295
    %v297 = vmul.f32 %v296, %v277
    %v298 = vsub.f32 %v29, %v297
    %v299 = vlaneseq
    %v300 = vshrl.u32 %v299, 7
    %v301 = vsub.s32 0, %v300
    %v302 = vrot.slane %v296, %v301
    %v303 = vmul.f32 %v265, %v302
    %v304 = vmul.f32 %v266, %v302
    %v305 = vmul.f32 %v267, %v302
    %v306 = vlaneseq
    %v307 = vshrl.u32 %v306, 7
    %v308 = vsub.s32 0, %v307
    %v309 = vrot.slane %v298, %v308
    %v310 = vadd.f32 %v303, %v309
    %v311 = vadd.f32 %v304, %v309
    %v312 = vadd.f32 %v305, %v309
    %vm313 = vcmask 261120
    %314 = vst.msk [vmem:[#allocation2] sm:$0xff] %vm313, %v310
    %315 = vst.msk [vmem:[#allocation2 + $0x8] sm:$0xff] %vm313, %v311
    %vm316 = vcmask 254976
    %317 = vst.msk [vmem:[#allocation2 + $0x10] sm:$0x3] %vm316, %v312
    // Predicated region
    $region18: #{inblock_fc_forward.1} parent=1 // pred_check
      _
    $region19: #{inblock_fc_forward.1} parent=1 // pred_check_branch
      %319 = sbr.rel (0) target = $region21
    $region20: #{inblock_fc_forward.1} parent=1 // pred_region
      %s321 = ssub.s32 384, 384
      %322 = vsyncadd [#allocation3], %s321
      %s323 = sshll.u32 [#allocation2], 4
      %s324 = int_to_ptr.vmem [resolvable:$true] %s323
      %329 = dma.vmem_to_hbm [thread:$0]  %s324, 384, %s4, [#allocation3], 128, 128, 8
    $region21: #{inblock_fc_forward.1} parent=1 // pred_fallthru
      _
    // Predicated region
    $region22: #{inblock_fc_forward.1} parent=1 // pred_check
      _
    $region23: #{inblock_fc_forward.1} parent=1 // pred_check_branch
      %331 = sbr.rel (0) target = $region25
    $region24: #{inblock_fc_forward.1} parent=1 // pred_region
      %332 = dma.done [#allocation3], 384
    $region25: #{inblock_fc_forward.1} parent=1 // pred_fallthru
      _
    %333 = vsyncpa [#allocation3], 1

</llo_original>
